<compile_context>
chip_gen: v6e
topology: v6e:2x2x1
jax: 0.10.0
libtpu: 0.0.40
codegen_flags: <defaults>
</compile_context>

<pallas_src>
import math

import jax
import jax.numpy as jnp
from jax.experimental import pallas as pl
from jax.experimental.pallas import tpu as pltpu


def _pick_batch_tile(B):
    for cand in (128, 64, 32, 16, 8):
        if B % cand == 0:
            return cand
    return B  # small / awkward batch: one full-B block


def _pick_feature_tile(D_pad, tB):
    # Target ~2 MiB per input tile (near HBM roofline per measured tiled-add
    # numbers), multiple of 128 lanes, dividing D_pad, capped at 2048 lanes.
    budget = max(128, ((2 * 1024 * 1024) // (4 * tB)) // 128 * 128)
    budget = min(budget, 2048, D_pad)
    tD = 128  # always divides D_pad (D_pad is a multiple of 128)
    for cand in range(budget, 127, -128):
        if D_pad % cand == 0:
            tD = cand
            break
    return tD


def make_vae_loss_kernel(tB, tD, sub):
    """Kernel over grid (nB, nD).  Emits per-B-block partial sums."""
    rows = tB // sub
    cols = tD // 128

    def kernel(xt_ref, xp_ref, mean_ref, lv_ref, z_ref, w_ref, b_ref, oh_ref,
               out_ref, acc_ref):
        j = pl.program_id(1)

        @pl.when(j == 0)
        def _():
            acc_ref[...] = jnp.zeros_like(acc_ref)

        # ---- MSE partial: runs every grid step (the only HBM-heavy work) ----
        xt = xt_ref[...].astype(jnp.float32)          # (tB, tD), cast in VMEM
        xp = xp_ref[...].astype(jnp.float32)
        diff = xp - xt
        sq = diff * diff

        # Fold (tB, tD) into the (sub, 128) accumulator with vreg-aligned
        # static slices: pure VPU adds, no per-step XLU reduction.
        partial = None
        for r in range(rows):
            for c in range(cols):
                chunk = sq[r * sub:(r + 1) * sub, c * 128:(c + 1) * 128]
                partial = chunk if partial is None else partial + chunk
        acc_ref[...] += partial

        # ---- tiny KLD + classifier + CE: once per B block, on last D step ----
        @pl.when(j == pl.num_programs(1) - 1)
        def _():
            rec_sum = jnp.sum(acc_ref[...])           # single XLU reduce

            m = mean_ref[...].astype(jnp.float32)     # (tB, L)
            lv = lv_ref[...].astype(jnp.float32)
            kld_sum = jnp.sum(-0.5 * (1.0 + lv - m * m - jnp.exp(lv)))

            zt = z_ref[...].astype(jnp.float32)       # (tB, L)
            w = w_ref[...].astype(jnp.float32)        # (L, n_classes)
            b = b_ref[...].astype(jnp.float32)        # (1, n_classes)
            logits = jnp.dot(zt, w, preferred_element_type=jnp.float32) + b

            # numerically stable log-sum-exp
            mx = jnp.max(logits, axis=1, keepdims=True)
            lse = mx + jnp.log(jnp.sum(jnp.exp(logits - mx), axis=1,
                                       keepdims=True))            # (tB, 1)
            oh = oh_ref[...].astype(jnp.float32)                  # (tB, C)
            # rows with an all-zero one-hot (no label) contribute exactly 0
            ce_sum = jnp.sum(oh * (lse - logits))

            lane = jax.lax.broadcasted_iota(jnp.int32, (8, 128), 1)
            slane = jax.lax.broadcasted_iota(jnp.int32, (8, 128), 0)
            out = jnp.zeros((8, 128), jnp.float32)
            out = jnp.where((slane == 0) & (lane == 0), rec_sum, out)
            out = jnp.where((slane == 0) & (lane == 1), kld_sum, out)
            out = jnp.where((slane == 0) & (lane == 2), ce_sum, out)
            out_ref[...] = out

    return kernel


def vae_loss_classes(x_true, x_pred, mean, log_var, z, label_true,
                     fc_w, fc_b, *, rec_weight, kld_weight, ce_weight):
    """JAX wrapper reproducing VaeLossClasses.forward.

    x_true / x_pred: (B, C, H, W);  mean / log_var / z: (B, L);
    label_true: (B,) int or None;  fc_w: (n_classes, L);  fc_b: (n_classes,)
    Returns (loss, rec, kld, ce) as float32 scalars.
    """
    B = x_true.shape[0]
    D = int(math.prod(x_true.shape[1:]))
    L = z.shape[1]
    n_classes = fc_w.shape[0]

    # View as (B, D) in the ORIGINAL dtype (no f32 pre-cast; cast is per-tile
    # inside the kernel).  Pad D to a multiple of 128 only if needed; the
    # zero-padded elements contribute 0 to the squared-error sum.
    xt2 = jnp.reshape(x_true, (B, D))
    xp2 = jnp.reshape(x_pred, (B, D))
    D_pad = ((D + 127) // 128) * 128
    if D_pad != D:
        pad = ((0, 0), (0, D_pad - D))
        xt2 = jnp.pad(xt2, pad)
        xp2 = jnp.pad(xp2, pad)

    tB = _pick_batch_tile(B)
    tD = _pick_feature_tile(D_pad, tB)
    sub = 8 if tB % 8 == 0 else tB
    nB = B // tB
    nD = D_pad // tD

    w_t = jnp.transpose(fc_w).astype(jnp.float32)       # (L, n_classes), tiny
    b2 = jnp.reshape(fc_b, (1, n_classes)).astype(jnp.float32)

    have_labels = (label_true is not None) and (label_true.shape[0] == B)
    if have_labels:
        onehot = (label_true.astype(jnp.int32)[:, None]
                  == jnp.arange(n_classes, dtype=jnp.int32)[None, :]
                  ).astype(jnp.float32)
    else:
        # No labels: the (tiny) classifier head still runs once per B block,
        # but with an all-zero one-hot its CE contribution is exactly 0
        # (matching the PyTorch ce = 0.0 branch).
        # TODO(synk): a separate kernel variant without the CE head would skip
        # even that negligible work.
        onehot = jnp.zeros((B, n_classes), jnp.float32)

    kernel = make_vae_loss_kernel(tB, tD, sub)

    in_specs = [
        pl.BlockSpec((tB, tD), lambda i, j: (i, j)),         # x_true tile
        pl.BlockSpec((tB, tD), lambda i, j: (i, j)),         # x_pred tile
        pl.BlockSpec((tB, L), lambda i, j: (i, 0)),          # mean   (resident per B block)
        pl.BlockSpec((tB, L), lambda i, j: (i, 0)),          # log_var
        pl.BlockSpec((tB, L), lambda i, j: (i, 0)),          # z
        pl.BlockSpec((L, n_classes), lambda i, j: (0, 0)),   # W^T (resident)
        pl.BlockSpec((1, n_classes), lambda i, j: (0, 0)),   # b   (resident)
        pl.BlockSpec((tB, n_classes), lambda i, j: (i, 0)),  # one-hot labels
    ]
    out_specs = pl.BlockSpec((None, 8, 128), lambda i, j: (i, 0, 0))
    out_shape = jax.ShapeDtypeStruct((nB, 8, 128), jnp.float32)

    partials = pl.pallas_call(
        kernel,
        grid=(nB, nD),
        in_specs=in_specs,
        out_specs=out_specs,
        out_shape=out_shape,
        scratch_shapes=[pltpu.VMEM((sub, 128), jnp.float32)],
        compiler_params=pltpu.CompilerParams(
            dimension_semantics=("parallel", "arbitrary"),
            vmem_limit_bytes=32 * 1024 * 1024),
    )(xt2, xp2, mean, log_var, z, w_t, b2, onehot)

    # Final normalization / weighting on scalars (free).
    rec = jnp.sum(partials[:, 0, 0]) / float(B * D)
    kld = jnp.sum(partials[:, 0, 1]) / float(B)
    ce = (jnp.sum(partials[:, 0, 2]) / float(B)) if have_labels \
        else jnp.float32(0.0)
    loss = rec * rec_weight + kld * kld_weight + ce * ce_weight
    return loss, rec, kld, ce


if __name__ == "__main__":
    # Small, deterministic example shapes (D = 4*32*32 = 4096 so the D grid has
    # more than one step and exercises the accumulator / finalize paths).
    B, C, H, W = 2, 4, 32, 32
    L = 32          # lspace_size
    n_classes = 8
    rec_weight, kld_weight, ce_weight = 1.0, 0.5, 0.25

    key = jax.random.PRNGKey(0)
    k = jax.random.split(key, 8)
    x_true = jax.random.normal(k[0], (B, C, H, W), jnp.float32)
    x_pred = jax.random.normal(k[1], (B, C, H, W), jnp.float32)
    mean = jax.random.normal(k[2], (B, L), jnp.float32)
    log_var = 0.1 * jax.random.normal(k[3], (B, L), jnp.float32)
    z = jax.random.normal(k[4], (B, L), jnp.float32)
    label_true = jax.random.randint(k[5], (B,), 0, n_classes, jnp.int32)

    # Deterministic nn.Linear(L, n_classes) init (uniform(-1/sqrt(L), 1/sqrt(L))).
    bound = 1.0 / math.sqrt(L)
    fc_w = jax.random.uniform(k[6], (n_classes, L), jnp.float32, -bound, bound)
    fc_b = jax.random.uniform(k[7], (n_classes,), jnp.float32, -bound, bound)

    loss, rec, kld, ce = vae_loss_classes(
        x_true, x_pred, mean, log_var, z, label_true, fc_w, fc_b,
        rec_weight=rec_weight, kld_weight=kld_weight, ce_weight=ce_weight)
    jax.block_until_ready((loss, rec, kld, ce))

    # Pure-JAX reference check.
    rec_ref = jnp.mean((x_pred - x_true) ** 2)
    kld_ref = jnp.mean(-0.5 * jnp.sum(1 + log_var - mean**2 - jnp.exp(log_var),
                                      axis=1))
    logits_ref = z @ fc_w.T + fc_b
    ce_ref = jnp.mean(jax.nn.logsumexp(logits_ref, axis=1)
                      - logits_ref[jnp.arange(B), label_true])
    loss_ref = rec_ref * rec_weight + kld_ref * kld_weight + ce_ref * ce_weight
    assert jnp.allclose(rec, rec_ref, rtol=1e-4, atol=1e-5)
    assert jnp.allclose(kld, kld_ref, rtol=1e-4, atol=1e-5)
    assert jnp.allclose(ce, ce_ref, rtol=1e-4, atol=1e-5)
    assert jnp.allclose(loss, loss_ref, rtol=1e-4, atol=1e-5)

    print("KERNEL_OK")
</pallas_src>

<mosaic_0001>
module attributes {stable_mosaic.version = 11 : i64} {
  func.func @kernel(%arg0: i32, %arg1: i32, %arg2: memref<2x2048xf32, #tpu.memory_space<vmem>>, %arg3: memref<2x2048xf32, #tpu.memory_space<vmem>>, %arg4: memref<2x32xf32, #tpu.memory_space<vmem>>, %arg5: memref<2x32xf32, #tpu.memory_space<vmem>>, %arg6: memref<2x32xf32, #tpu.memory_space<vmem>>, %arg7: memref<32x8xf32, #tpu.memory_space<vmem>>, %arg8: memref<1x8xf32, #tpu.memory_space<vmem>>, %arg9: memref<2x8xf32, #tpu.memory_space<vmem>>, %arg10: memref<1x8x128xf32, #tpu.memory_space<vmem>>, %arg11: memref<2x128xf32, #tpu.memory_space<vmem>>) attributes {dimension_semantics = [#tpu.dimension_semantics<parallel>, #tpu.dimension_semantics<arbitrary>], iteration_bounds = array<i64: 1, 2>, scalar_prefetch = 0 : i64, scratch_operands = 1 : i64, tpu.core_type = #tpu.core_type<tc>, window_params = [{transform_indices = @transform_0, window_bounds = array<i64: 2, 2048>}, {transform_indices = @transform_1, window_bounds = array<i64: 2, 2048>}, {transform_indices = @transform_2, window_bounds = array<i64: 2, 32>}, {transform_indices = @transform_3, window_bounds = array<i64: 2, 32>}, {transform_indices = @transform_4, window_bounds = array<i64: 2, 32>}, {pipeline_mode = #tpu.pipeline_mode<synchronous>, transform_indices = @transform_5, window_bounds = array<i64: 32, 8>}, {pipeline_mode = #tpu.pipeline_mode<synchronous>, transform_indices = @transform_6, window_bounds = array<i64: 1, 8>}, {transform_indices = @transform_7, window_bounds = array<i64: 2, 8>}, {transform_indices = @transform_8, window_bounds = array<i64: 1, 8, 128>}]} {
    %c0_i32 = arith.constant 0 : i32
    %0 = arith.cmpi eq, %arg1, %c0_i32 : i32
    %1 = arith.extui %0 : i1 to i32
    %c0_i32_0 = arith.constant 0 : i32
    %2 = arith.cmpi ne, %1, %c0_i32_0 : i32
    scf.if %2 {
      %cst = arith.constant 0.000000e+00 : f32
      %44 = vector.broadcast %cst : f32 to vector<2x128xf32>
      %c0_9 = arith.constant 0 : index
      %c0_10 = arith.constant 0 : index
      %45 = vector.load %arg11[%c0_9, %c0_10] : memref<2x128xf32, #tpu.memory_space<vmem>>, vector<2x128xf32>
      tpu.vector_store %arg11[%c0_9, %c0_10], %44 {strides = array<i32>} : memref<2x128xf32, #tpu.memory_space<vmem>>, vector<2x128xf32>,
    } else {
    }
    %c0 = arith.constant 0 : index
    %c0_1 = arith.constant 0 : index
    %3 = vector.load %arg2[%c0, %c0_1] : memref<2x2048xf32, #tpu.memory_space<vmem>>, vector<2x2048xf32>
    %c0_2 = arith.constant 0 : index
    %c0_3 = arith.constant 0 : index
    %4 = vector.load %arg3[%c0_2, %c0_3] : memref<2x2048xf32, #tpu.memory_space<vmem>>, vector<2x2048xf32>
    %5 = arith.subf %4, %3 : vector<2x2048xf32>
    %6 = arith.mulf %5, %5 : vector<2x2048xf32>
    %7 = vector.extract_strided_slice %6 {offsets = [0, 0], sizes = [2, 128], strides = [1, 1]} : vector<2x2048xf32> to vector<2x128xf32>
    %8 = vector.extract_strided_slice %6 {offsets = [0, 128], sizes = [2, 128], strides = [1, 1]} : vector<2x2048xf32> to vector<2x128xf32>
    %9 = arith.addf %7, %8 : vector<2x128xf32>
    %10 = vector.extract_strided_slice %6 {offsets = [0, 256], sizes = [2, 128], strides = [1, 1]} : vector<2x2048xf32> to vector<2x128xf32>
    %11 = arith.addf %9, %10 : vector<2x128xf32>
    %12 = vector.extract_strided_slice %6 {offsets = [0, 384], sizes = [2, 128], strides = [1, 1]} : vector<2x2048xf32> to vector<2x128xf32>
    %13 = arith.addf %11, %12 : vector<2x128xf32>
    %14 = vector.extract_strided_slice %6 {offsets = [0, 512], sizes = [2, 128], strides = [1, 1]} : vector<2x2048xf32> to vector<2x128xf32>
    %15 = arith.addf %13, %14 : vector<2x128xf32>
    %16 = vector.extract_strided_slice %6 {offsets = [0, 640], sizes = [2, 128], strides = [1, 1]} : vector<2x2048xf32> to vector<2x128xf32>
    %17 = arith.addf %15, %16 : vector<2x128xf32>
    %18 = vector.extract_strided_slice %6 {offsets = [0, 768], sizes = [2, 128], strides = [1, 1]} : vector<2x2048xf32> to vector<2x128xf32>
    %19 = arith.addf %17, %18 : vector<2x128xf32>
    %20 = vector.extract_strided_slice %6 {offsets = [0, 896], sizes = [2, 128], strides = [1, 1]} : vector<2x2048xf32> to vector<2x128xf32>
    %21 = arith.addf %19, %20 : vector<2x128xf32>
    %22 = vector.extract_strided_slice %6 {offsets = [0, 1024], sizes = [2, 128], strides = [1, 1]} : vector<2x2048xf32> to vector<2x128xf32>
    %23 = arith.addf %21, %22 : vector<2x128xf32>
    %24 = vector.extract_strided_slice %6 {offsets = [0, 1152], sizes = [2, 128], strides = [1, 1]} : vector<2x2048xf32> to vector<2x128xf32>
    %25 = arith.addf %23, %24 : vector<2x128xf32>
    %26 = vector.extract_strided_slice %6 {offsets = [0, 1280], sizes = [2, 128], strides = [1, 1]} : vector<2x2048xf32> to vector<2x128xf32>
    %27 = arith.addf %25, %26 : vector<2x128xf32>
    %28 = vector.extract_strided_slice %6 {offsets = [0, 1408], sizes = [2, 128], strides = [1, 1]} : vector<2x2048xf32> to vector<2x128xf32>
    %29 = arith.addf %27, %28 : vector<2x128xf32>
    %30 = vector.extract_strided_slice %6 {offsets = [0, 1536], sizes = [2, 128], strides = [1, 1]} : vector<2x2048xf32> to vector<2x128xf32>
    %31 = arith.addf %29, %30 : vector<2x128xf32>
    %32 = vector.extract_strided_slice %6 {offsets = [0, 1664], sizes = [2, 128], strides = [1, 1]} : vector<2x2048xf32> to vector<2x128xf32>
    %33 = arith.addf %31, %32 : vector<2x128xf32>
    %34 = vector.extract_strided_slice %6 {offsets = [0, 1792], sizes = [2, 128], strides = [1, 1]} : vector<2x2048xf32> to vector<2x128xf32>
    %35 = arith.addf %33, %34 : vector<2x128xf32>
    %36 = vector.extract_strided_slice %6 {offsets = [0, 1920], sizes = [2, 128], strides = [1, 1]} : vector<2x2048xf32> to vector<2x128xf32>
    %37 = arith.addf %35, %36 : vector<2x128xf32>
    %c0_4 = arith.constant 0 : index
    %c0_5 = arith.constant 0 : index
    %38 = vector.load %arg11[%c0_4, %c0_5] : memref<2x128xf32, #tpu.memory_space<vmem>>, vector<2x128xf32>
    %39 = arith.addf %38, %37 : vector<2x128xf32>
    %c0_6 = arith.constant 0 : index
    %c0_7 = arith.constant 0 : index
    %40 = vector.load %arg11[%c0_6, %c0_7] : memref<2x128xf32, #tpu.memory_space<vmem>>, vector<2x128xf32>
    tpu.vector_store %arg11[%c0_6, %c0_7], %39 {strides = array<i32>} : memref<2x128xf32, #tpu.memory_space<vmem>>, vector<2x128xf32>,
    %c1_i32 = arith.constant 1 : i32
    %41 = arith.cmpi eq, %arg1, %c1_i32 : i32
    %42 = arith.extui %41 : i1 to i32
    %c0_i32_8 = arith.constant 0 : i32
    %43 = arith.cmpi ne, %42, %c0_i32_8 : i32
    scf.if %43 {
      %c0_9 = arith.constant 0 : index
      %c0_10 = arith.constant 0 : index
      %44 = vector.load %arg11[%c0_9, %c0_10] : memref<2x128xf32, #tpu.memory_space<vmem>>, vector<2x128xf32>
      %45 = vector.shape_cast %44 : vector<2x128xf32> to vector<1x2x128xf32>
      %cst = arith.constant dense<0.000000e+00> : vector<1xf32>
      %46 = vector.multi_reduction <add>, %45, %cst [1, 2] : vector<1x2x128xf32> to vector<1xf32>
      %47 = vector.shape_cast %46 : vector<1xf32> to vector<1x1x1xf32>
      %48 = vector.extract %47[0, 0, 0] : f32 from vector<1x1x1xf32>
      %c0_11 = arith.constant 0 : index
      %c0_12 = arith.constant 0 : index
      %49 = vector.load %arg4[%c0_11, %c0_12] : memref<2x32xf32, #tpu.memory_space<vmem>>, vector<2x32xf32>
      %c0_13 = arith.constant 0 : index
      %c0_14 = arith.constant 0 : index
      %50 = vector.load %arg5[%c0_13, %c0_14] : memref<2x32xf32, #tpu.memory_space<vmem>>, vector<2x32xf32>
      %cst_15 = arith.constant 1.000000e+00 : f32
      %51 = vector.broadcast %cst_15 : f32 to vector<2x32xf32>
      %52 = arith.addf %51, %50 : vector<2x32xf32>
      %53 = arith.mulf %49, %49 : vector<2x32xf32>
      %54 = arith.subf %52, %53 : vector<2x32xf32>
      %55 = math.exp %50 : vector<2x32xf32>
      %56 = arith.subf %54, %55 : vector<2x32xf32>
      %cst_16 = arith.constant -5.000000e-01 : f32
      %57 = vector.broadcast %cst_16 : f32 to vector<2x32xf32>
      %58 = arith.mulf %57, %56 : vector<2x32xf32>
      %59 = vector.shape_cast %58 : vector<2x32xf32> to vector<1x2x32xf32>
      %cst_17 = arith.constant dense<0.000000e+00> : vector<1xf32>
      %60 = vector.multi_reduction <add>, %59, %cst_17 [1, 2] : vector<1x2x32xf32> to vector<1xf32>
      %61 = vector.shape_cast %60 : vector<1xf32> to vector<1x1x1xf32>
      %62 = vector.extract %61[0, 0, 0] : f32 from vector<1x1x1xf32>
      %c0_18 = arith.constant 0 : index
      %c0_19 = arith.constant 0 : index
      %63 = vector.load %arg6[%c0_18, %c0_19] : memref<2x32xf32, #tpu.memory_space<vmem>>, vector<2x32xf32>
      %c0_20 = arith.constant 0 : index
      %c0_21 = arith.constant 0 : index
      %64 = vector.load %arg7[%c0_20, %c0_21] : memref<32x8xf32, #tpu.memory_space<vmem>>, vector<32x8xf32>
      %c0_22 = arith.constant 0 : index
      %c0_23 = arith.constant 0 : index
      %65 = vector.load %arg8[%c0_22, %c0_23] : memref<1x8xf32, #tpu.memory_space<vmem>>, vector<1x8xf32>
      %cst_24 = arith.constant dense<0.000000e+00> : vector<2x8xf32>
      %66 = tpu.matmul %63, %64, %cst_24 {dimension_numbers = #tpu.dot_dimension_numbers<[1], [0], [0], [1], [0, 0, 1, 1], [], []>} : vector<2x32xf32>, vector<32x8xf32>, vector<2x8xf32> -> vector<2x8xf32>
      %67 = vector.broadcast %65 : vector<1x8xf32> to vector<2x8xf32>
      %68 = arith.addf %66, %67 : vector<2x8xf32>
      %cst_25 = arith.constant dense<0xFF800000> : vector<2xf32>
      %69 = vector.multi_reduction <maximumf>, %68, %cst_25 [1] : vector<2x8xf32> to vector<2xf32>
      %70 = vector.shape_cast %69 : vector<2xf32> to vector<2x1xf32>
      %71 = vector.broadcast %70 : vector<2x1xf32> to vector<2x8xf32>
      %72 = arith.subf %68, %71 : vector<2x8xf32>
      %73 = math.exp %72 : vector<2x8xf32>
      %cst_26 = arith.constant dense<0.000000e+00> : vector<2xf32>
      %74 = vector.multi_reduction <add>, %73, %cst_26 [1] : vector<2x8xf32> to vector<2xf32>
      %75 = vector.shape_cast %74 : vector<2xf32> to vector<2x1xf32>
      %76 = math.log %75 : vector<2x1xf32>
      %77 = arith.addf %70, %76 : vector<2x1xf32>
      %c0_27 = arith.constant 0 : index
      %c0_28 = arith.constant 0 : index
      %78 = vector.load %arg9[%c0_27, %c0_28] : memref<2x8xf32, #tpu.memory_space<vmem>>, vector<2x8xf32>
      %79 = vector.broadcast %77 : vector<2x1xf32> to vector<2x8xf32>
      %80 = arith.subf %79, %68 : vector<2x8xf32>
      %81 = arith.mulf %78, %80 : vector<2x8xf32>
      %82 = vector.shape_cast %81 : vector<2x8xf32> to vector<1x2x8xf32>
      %cst_29 = arith.constant dense<0.000000e+00> : vector<1xf32>
      %83 = vector.multi_reduction <add>, %82, %cst_29 [1, 2] : vector<1x2x8xf32> to vector<1xf32>
      %84 = vector.shape_cast %83 : vector<1xf32> to vector<1x1x1xf32>
      %85 = vector.extract %84[0, 0, 0] : f32 from vector<1x1x1xf32>
      %86 = tpu.iota {dimensions = array<i32: 1>} : vector<8x128xi32>
      %87 = tpu.iota {dimensions = array<i32: 0>} : vector<8x128xi32>
      %cst_30 = arith.constant 0.000000e+00 : f32
      %88 = vector.broadcast %cst_30 : f32 to vector<8x128xf32>
      %c0_i32_31 = arith.constant 0 : i32
      %89 = vector.broadcast %c0_i32_31 : i32 to vector<8x128xi32>
      %90 = arith.cmpi eq, %87, %89 : vector<8x128xi32>
      %c0_i32_32 = arith.constant 0 : i32
      %91 = vector.broadcast %c0_i32_32 : i32 to vector<8x128xi32>
      %92 = arith.cmpi eq, %86, %91 : vector<8x128xi32>
      %93 = arith.andi %90, %92 : vector<8x128xi1>
      %94 = vector.broadcast %48 : f32 to vector<8x128xf32>
      %95 = arith.select %93, %94, %88 : vector<8x128xi1>, vector<8x128xf32>
      %c0_i32_33 = arith.constant 0 : i32
      %96 = vector.broadcast %c0_i32_33 : i32 to vector<8x128xi32>
      %97 = arith.cmpi eq, %87, %96 : vector<8x128xi32>
      %c1_i32_34 = arith.constant 1 : i32
      %98 = vector.broadcast %c1_i32_34 : i32 to vector<8x128xi32>
      %99 = arith.cmpi eq, %86, %98 : vector<8x128xi32>
      %100 = arith.andi %97, %99 : vector<8x128xi1>
      %101 = vector.broadcast %62 : f32 to vector<8x128xf32>
      %102 = arith.select %100, %101, %95 : vector<8x128xi1>, vector<8x128xf32>
      %c0_i32_35 = arith.constant 0 : i32
      %103 = vector.broadcast %c0_i32_35 : i32 to vector<8x128xi32>
      %104 = arith.cmpi eq, %87, %103 : vector<8x128xi32>
      %c2_i32 = arith.constant 2 : i32
      %105 = vector.broadcast %c2_i32 : i32 to vector<8x128xi32>
      %106 = arith.cmpi eq, %86, %105 : vector<8x128xi32>
      %107 = arith.andi %104, %106 : vector<8x128xi1>
      %108 = vector.broadcast %85 : f32 to vector<8x128xf32>
      %109 = arith.select %107, %108, %102 : vector<8x128xi1>, vector<8x128xf32>
      %c0_36 = arith.constant 0 : index
      %c0_37 = arith.constant 0 : index
      %c0_38 = arith.constant 0 : index
      %110 = vector.load %arg10[%c0_36, %c0_37, %c0_38] : memref<1x8x128xf32, #tpu.memory_space<vmem>>, vector<1x8x128xf32>
      %111 = vector.shape_cast %110 : vector<1x8x128xf32> to vector<8x128xf32>
      %112 = vector.shape_cast %109 : vector<8x128xf32> to vector<1x8x128xf32>
      tpu.vector_store %arg10[%c0_36, %c0_37, %c0_38], %112 {strides = array<i32>} : memref<1x8x128xf32, #tpu.memory_space<vmem>>, vector<1x8x128xf32>,
    } else {
    }
    return
  }
  func.func @transform_0(%arg0: i32, %arg1: i32) -> (i32, i32) {
    %c0_i32 = arith.constant 0 : i32
    return %arg0, %arg1 : i32, i32
  }
  func.func @transform_1(%arg0: i32, %arg1: i32) -> (i32, i32) {
    %c0_i32 = arith.constant 0 : i32
    return %arg0, %arg1 : i32, i32
  }
  func.func @transform_2(%arg0: i32, %arg1: i32) -> (i32, i32) {
    %c0_i32 = arith.constant 0 : i32
    %c0_i32_0 = arith.constant 0 : i32
    return %arg0, %c0_i32 : i32, i32
  }
  func.func @transform_3(%arg0: i32, %arg1: i32) -> (i32, i32) {
    %c0_i32 = arith.constant 0 : i32
    %c0_i32_0 = arith.constant 0 : i32
    return %arg0, %c0_i32 : i32, i32
  }
  func.func @transform_4(%arg0: i32, %arg1: i32) -> (i32, i32) {
    %c0_i32 = arith.constant 0 : i32
    %c0_i32_0 = arith.constant 0 : i32
    return %arg0, %c0_i32 : i32, i32
  }
  func.func @transform_5(%arg0: i32, %arg1: i32) -> (i32, i32) {
    %c0_i32 = arith.constant 0 : i32
    %c0_i32_0 = arith.constant 0 : i32
    %c0_i32_1 = arith.constant 0 : i32
    return %c0_i32, %c0_i32_0 : i32, i32
  }
  func.func @transform_6(%arg0: i32, %arg1: i32) -> (i32, i32) {
    %c0_i32 = arith.constant 0 : i32
    %c0_i32_0 = arith.constant 0 : i32
    %c0_i32_1 = arith.constant 0 : i32
    return %c0_i32, %c0_i32_0 : i32, i32
  }
  func.func @transform_7(%arg0: i32, %arg1: i32) -> (i32, i32) {
    %c0_i32 = arith.constant 0 : i32
    %c0_i32_0 = arith.constant 0 : i32
    return %arg0, %c0_i32 : i32, i32
  }
  func.func @transform_8(%arg0: i32, %arg1: i32) -> (i32, i32, i32) {
    %c0_i32 = arith.constant 0 : i32
    %c0_i32_0 = arith.constant 0 : i32
    %c0_i32_1 = arith.constant 0 : i32
    return %arg0, %c0_i32, %c0_i32_0 : i32, i32, i32
  }
}

</mosaic_0001>

<llo_original>
// kernel: tpu_custom_call.1
$region0: #{tpu_custom_call.1}
  #allocation0 [shape = 'u32[]', space=smem, size = 0x4, offset = 0x4, fixed_abs, tag = 'smem constant byte address 0x4 - core index']
  #allocation1 [shape = 'u32[144,128]{1,0:T(1,128)}', space=vmem, size = 0x12000, scoped, tag = 'internal scratch']
  #allocation2 [shape = 'f32[2,128]{1,0:T(2,128)}', space=vmem, size = 0x400, scoped, tag = 'scratch operand']
  %s0 = inlined_call_operand.hbm [shape: f32[2,4096], index: 0, kind: input, shape index: {}]
  %s1 = inlined_call_operand.hbm [shape: f32[2,4096], index: 1, kind: input, shape index: {}]
  %s2 = inlined_call_operand.vmem [shape: f32[2,32], index: 2, kind: input, shape index: {}]
  %s3 = inlined_call_operand.vmem [shape: f32[2,32], index: 3, kind: input, shape index: {}]
  %s4 = inlined_call_operand.vmem [shape: f32[2,32], index: 4, kind: input, shape index: {}]
  %s5 = inlined_call_operand.vmem [shape: f32[32,8], index: 5, kind: input, shape index: {}]
  %s6 = inlined_call_operand.vmem [shape: f32[1,8], index: 6, kind: input, shape index: {}]
  %s7 = inlined_call_operand.vmem [shape: f32[2,8], index: 7, kind: input, shape index: {}]
  %s8 = inlined_call_operand.hbm [shape: f32[1,8,128], index: 8, kind: output, shape index: {}]
  %s9 = sld [smem:[#allocation0]]
  $region81: #{tpu_custom_call.1} parent=0
    _
  %s11 = ssub.s32 1, %s9
  %s12 = scalar_select 0, %s11, %s9
  $region1: #{tpu_custom_call.1} parent=0
    #allocation3 [shape = 'u8[32768]{0}', space=vmem, size = 0x8000, scoped, tag = 'input window, operand 0']
    #allocation4 [shape = 's32[2]{0}', space=sflag, size = 0x8, scoped, tag = 'scoped memory for tpu_custom_call.1']
    #allocation5 [shape = 's32[2]{0}', space=sflag, size = 0x8, scoped, tag = 'scoped memory for tpu_custom_call.1']
    #allocation6 [shape = 'u8[32768]{0}', space=vmem, size = 0x8000, scoped, tag = 'input window, operand 1']
    #allocation7 [shape = 's32[2]{0}', space=sflag, size = 0x8, scoped, tag = 'scoped memory for tpu_custom_call.1']
    #allocation8 [shape = 'u8[4096]{0}', space=vmem, size = 0x1000, scoped, tag = 'output window, operand 0, single buffered']
    %13 = vsyncpa [#allocation4], 0
    %s14 = scalar_lea.sflag [#allocation4], 1
    %15 = vsyncpa %s14, 0
    %16 = vsyncpa [#allocation7], 0
    %s17 = scalar_lea.sflag [#allocation7], 1
    %18 = vsyncpa %s17, 0
    %19 = vsyncpa [#allocation5], 0
    loop: start=0, step=1, limit=4
    $region2: #{tpu_custom_call.1} parent=1 // loop_pre_header
      _
    $region3: #{tpu_custom_call.1} parent=1 // loop_header
      %s21 = sphi 0, %s25
      %p22 = scmp.ge.s32.totalorder %s21, 4
      %s28 = sphi 0, %s40
      %s29 = sphi 0, %s36
      %s30 = sphi 0, %s28
      %s31 = sphi 0, %s29
      %s32 = sphi 0, %s30
      %s33 = sphi 0, %s31
      %s45 = sphi 0, %s47
      %s48 = sphi 0, %s45
      %s49 = sphi 0, %s48
      %s65 = sphi 0, %s49
      %s73 = sphi 0, %s75
      %s76 = sphi 0, %s73
      %s77 = sphi 0, %s76
      %s93 = sphi 0, %s77
      %s99 = sphi 0, %s101
      %s102 = sphi 0, %s99
      %s103 = sphi 0, %s102
      %s119 = sphi 0, %s103
      %s125 = sphi 0, %s127
      %s128 = sphi 0, %s125
      %s129 = sphi 0, %s128
      %s145 = sphi 0, %s129
      %s151 = sphi 0, %s153
      %s154 = sphi 0, %s151
      %s155 = sphi 0, %s154
      %s171 = sphi 0, %s155
      %s175 = sphi 0, %s175
      %s177 = sphi 0, %s175
      %s178 = sphi 0, %s177
      %s192 = sphi 0, %s178
      %s196 = sphi 0, %s196
      %s198 = sphi 0, %s196
      %s199 = sphi 0, %s198
      %s213 = sphi 0, %s199
      %s219 = sphi 0, %s221
      %s222 = sphi 0, %s219
      %s223 = sphi 0, %s222
      %s239 = sphi 0, %s223
      %s245 = sphi 0, %s247
      %s248 = sphi 0, %s245
      %s249 = sphi 0, %s248
      %s265 = sphi 0, %s249
    $region4: #{tpu_custom_call.1} parent=1 // loop_header_branch
      %24 = sbr.rel (%p22) target = $region8
    $region5: #{tpu_custom_call.1} parent=1 // loop_body
      %s26 = ssub.s32 %s21, 1
      %s27 = ssub.s32 %s21, 2
      %s34 = sadd.s32 1, %s29
      %p35 = scmp.ge.s32.totalorder %s34, 2
      %s36 = scalar_select %p35, 0, %s34
      %s37 = sadd.s32 1, %s28
      %s38 = scalar_select %p35, %s37, %s28
      %p39 = scmp.ge.s32.totalorder %s38, 1
      %s40 = scalar_select %p39, 0, %s38
      %s41 = ssub.s32 %s28, %s40
      %s42 = ssub.s32 %s29, %s36
      %s43 = sor.u32 %s41, %s42
      %p44 = scmp.eq.s32.totalorder %s43, 0
      %s46 = sadd.s32 %s45, 1
      %s47 = scalar_select %p44, %s45, %s46
      %p50 = pneg %p44
      %p51 = scmp.eq.s32.totalorder %s21, 1
      %p52 = por %p50, %p51
      %p53 = scmp.ne.s32.totalorder %s45, %s48
      %p54 = scmp.eq.s32.totalorder %s21, 0
      %p55 = por %p53, %p54
      %p56 = scmp.ne.s32.totalorder %s45, %s48
      %p57 = scmp.eq.s32.totalorder %s26, 1
      %p58 = por %p56, %p57
      %p59 = scmp.ne.s32.totalorder %s48, %s49
      %p60 = scmp.eq.s32.totalorder %s26, 0
      %p61 = por %p59, %p60
      %p62 = scmp.ne.s32.totalorder %s48, %s49
      %p63 = scmp.eq.s32.totalorder %s27, 1
      %p64 = por %p62, %p63
      %p66 = scmp.ne.s32.totalorder %s49, %s65
      %p67 = scmp.eq.s32.totalorder %s27, 0
      %p68 = por %p66, %p67
      %s69 = ssub.s32 %s28, %s40
      %s70 = ssub.s32 %s29, %s36
      %s71 = sor.u32 %s69, %s70
      %p72 = scmp.eq.s32.totalorder %s71, 0
      %s74 = sadd.s32 %s73, 1
      %s75 = scalar_select %p72, %s73, %s74
      %p78 = pneg %p72
      %p79 = scmp.eq.s32.totalorder %s21, 1
      %p80 = por %p78, %p79
      %p81 = scmp.ne.s32.totalorder %s73, %s76
      %p82 = scmp.eq.s32.totalorder %s21, 0
      %p83 = por %p81, %p82
      %p84 = scmp.ne.s32.totalorder %s73, %s76
      %p85 = scmp.eq.s32.totalorder %s26, 1
      %p86 = por %p84, %p85
      %p87 = scmp.ne.s32.totalorder %s76, %s77
      %p88 = scmp.eq.s32.totalorder %s26, 0
      %p89 = por %p87, %p88
      %p90 = scmp.ne.s32.totalorder %s76, %s77
      %p91 = scmp.eq.s32.totalorder %s27, 1
      %p92 = por %p90, %p91
      %p94 = scmp.ne.s32.totalorder %s77, %s93
      %p95 = scmp.eq.s32.totalorder %s27, 0
      %p96 = por %p94, %p95
      %s97 = ssub.s32 %s28, %s40
      %p98 = scmp.eq.s32.totalorder %s97, 0
      %s100 = sadd.s32 %s99, 1
      %s101 = scalar_select %p98, %s99, %s100
      %p104 = pneg %p98
      %p105 = scmp.eq.s32.totalorder %s21, 1
      %p106 = por %p104, %p105
      %p107 = scmp.ne.s32.totalorder %s99, %s102
      %p108 = scmp.eq.s32.totalorder %s21, 0
      %p109 = por %p107, %p108
      %p110 = scmp.ne.s32.totalorder %s99, %s102
      %p111 = scmp.eq.s32.totalorder %s26, 1
      %p112 = por %p110, %p111
      %p113 = scmp.ne.s32.totalorder %s102, %s103
      %p114 = scmp.eq.s32.totalorder %s26, 0
      %p115 = por %p113, %p114
      %p116 = scmp.ne.s32.totalorder %s102, %s103
      %p117 = scmp.eq.s32.totalorder %s27, 1
      %p118 = por %p116, %p117
      %p120 = scmp.ne.s32.totalorder %s103, %s119
      %p121 = scmp.eq.s32.totalorder %s27, 0
      %p122 = por %p120, %p121
      %s123 = ssub.s32 %s28, %s40
      %p124 = scmp.eq.s32.totalorder %s123, 0
      %s126 = sadd.s32 %s125, 1
      %s127 = scalar_select %p124, %s125, %s126
      %p130 = pneg %p124
      %p131 = scmp.eq.s32.totalorder %s21, 1
      %p132 = por %p130, %p131
      %p133 = scmp.ne.s32.totalorder %s125, %s128
      %p134 = scmp.eq.s32.totalorder %s21, 0
      %p135 = por %p133, %p134
      %p136 = scmp.ne.s32.totalorder %s125, %s128
      %p137 = scmp.eq.s32.totalorder %s26, 1
      %p138 = por %p136, %p137
      %p139 = scmp.ne.s32.totalorder %s128, %s129
      %p140 = scmp.eq.s32.totalorder %s26, 0
      %p141 = por %p139, %p140
      %p142 = scmp.ne.s32.totalorder %s128, %s129
      %p143 = scmp.eq.s32.totalorder %s27, 1
      %p144 = por %p142, %p143
      %p146 = scmp.ne.s32.totalorder %s129, %s145
      %p147 = scmp.eq.s32.totalorder %s27, 0
      %p148 = por %p146, %p147
      %s149 = ssub.s32 %s28, %s40
      %p150 = scmp.eq.s32.totalorder %s149, 0
      %s152 = sadd.s32 %s151, 1
      %s153 = scalar_select %p150, %s151, %s152
      %p156 = pneg %p150
      %p157 = scmp.eq.s32.totalorder %s21, 1
      %p158 = por %p156, %p157
      %p159 = scmp.ne.s32.totalorder %s151, %s154
      %p160 = scmp.eq.s32.totalorder %s21, 0
      %p161 = por %p159, %p160
      %p162 = scmp.ne.s32.totalorder %s151, %s154
      %p163 = scmp.eq.s32.totalorder %s26, 1
      %p164 = por %p162, %p163
      %p165 = scmp.ne.s32.totalorder %s154, %s155
      %p166 = scmp.eq.s32.totalorder %s26, 0
      %p167 = por %p165, %p166
      %p168 = scmp.ne.s32.totalorder %s154, %s155
      %p169 = scmp.eq.s32.totalorder %s27, 1
      %p170 = por %p168, %p169
      %p172 = scmp.ne.s32.totalorder %s155, %s171
      %p173 = scmp.eq.s32.totalorder %s27, 0
      %p174 = por %p172, %p173
      %s176 = sadd.s32 %s175, 1
      %p179 = scmp.eq.s32.totalorder %s21, 1
      %p180 = scmp.ne.s32.totalorder %s175, %s177
      %p181 = scmp.eq.s32.totalorder %s21, 0
      %p182 = por %p180, %p181
      %p183 = scmp.ne.s32.totalorder %s175, %s177
      %p184 = scmp.eq.s32.totalorder %s26, 1
      %p185 = por %p183, %p184
      %p186 = scmp.ne.s32.totalorder %s177, %s178
      %p187 = scmp.eq.s32.totalorder %s26, 0
      %p188 = por %p186, %p187
      %p189 = scmp.ne.s32.totalorder %s177, %s178
      %p190 = scmp.eq.s32.totalorder %s27, 1
      %p191 = por %p189, %p190
      %p193 = scmp.ne.s32.totalorder %s178, %s192
      %p194 = scmp.eq.s32.totalorder %s27, 0
      %p195 = por %p193, %p194
      %s197 = sadd.s32 %s196, 1
      %p200 = scmp.eq.s32.totalorder %s21, 1
      %p201 = scmp.ne.s32.totalorder %s196, %s198
      %p202 = scmp.eq.s32.totalorder %s21, 0
      %p203 = por %p201, %p202
      %p204 = scmp.ne.s32.totalorder %s196, %s198
      %p205 = scmp.eq.s32.totalorder %s26, 1
      %p206 = por %p204, %p205
      %p207 = scmp.ne.s32.totalorder %s198, %s199
      %p208 = scmp.eq.s32.totalorder %s26, 0
      %p209 = por %p207, %p208
      %p210 = scmp.ne.s32.totalorder %s198, %s199
      %p211 = scmp.eq.s32.totalorder %s27, 1
      %p212 = por %p210, %p211
      %p214 = scmp.ne.s32.totalorder %s199, %s213
      %p215 = scmp.eq.s32.totalorder %s27, 0
      %p216 = por %p214, %p215
      %s217 = ssub.s32 %s28, %s40
      %p218 = scmp.eq.s32.totalorder %s217, 0
      %s220 = sadd.s32 %s219, 1
      %s221 = scalar_select %p218, %s219, %s220
      %p224 = pneg %p218
      %p225 = scmp.eq.s32.totalorder %s21, 1
      %p226 = por %p224, %p225
      %p227 = scmp.ne.s32.totalorder %s219, %s222
      %p228 = scmp.eq.s32.totalorder %s21, 0
      %p229 = por %p227, %p228
      %p230 = scmp.ne.s32.totalorder %s219, %s222
      %p231 = scmp.eq.s32.totalorder %s26, 1
      %p232 = por %p230, %p231
      %p233 = scmp.ne.s32.totalorder %s222, %s223
      %p234 = scmp.eq.s32.totalorder %s26, 0
      %p235 = por %p233, %p234
      %p236 = scmp.ne.s32.totalorder %s222, %s223
      %p237 = scmp.eq.s32.totalorder %s27, 1
      %p238 = por %p236, %p237
      %p240 = scmp.ne.s32.totalorder %s223, %s239
      %p241 = scmp.eq.s32.totalorder %s27, 0
      %p242 = por %p240, %p241
      %s243 = ssub.s32 %s28, %s40
      %p244 = scmp.eq.s32.totalorder %s243, 0
      %s246 = sadd.s32 %s245, 1
      %s247 = scalar_select %p244, %s245, %s246
      %p250 = pneg %p244
      %p251 = scmp.eq.s32.totalorder %s21, 1
      %p252 = por %p250, %p251
      %p253 = scmp.ne.s32.totalorder %s245, %s248
      %p254 = scmp.eq.s32.totalorder %s21, 0
      %p255 = por %p253, %p254
      %p256 = scmp.ne.s32.totalorder %s245, %s248
      %p257 = scmp.eq.s32.totalorder %s26, 1
      %p258 = por %p256, %p257
      %p259 = scmp.ne.s32.totalorder %s248, %s249
      %p260 = scmp.eq.s32.totalorder %s26, 0
      %p261 = por %p259, %p260
      %p262 = scmp.ne.s32.totalorder %s248, %s249
      %p263 = scmp.eq.s32.totalorder %s27, 1
      %p264 = por %p262, %p263
      %p266 = scmp.ne.s32.totalorder %s249, %s265
      %p267 = scmp.eq.s32.totalorder %s27, 0
      %p268 = por %p266, %p267
      %p269 = scmp.le.s32.totalorder 1, %s21
      %p270 = scmp.lt.s32.totalorder %s21, 3
      %p271 = pnand %p269, %p270
      %p272 = pneg %p271
      // Predicated region
      $region9: #{tpu_custom_call.1} parent=5 // pred_check
        _
      $region10: #{tpu_custom_call.1} parent=5 // pred_check_branch
        %274 = sbr.rel (%p271) target = $region12
      $region11: #{tpu_custom_call.1} parent=5 // pred_region
        %s275 = ssub.s32 %s21, 1
        // Predicated region
        $region13: #{tpu_custom_call.1} parent=11 // pred_check
          %p276 = pneg %p115
        $region14: #{tpu_custom_call.1} parent=11 // pred_check_branch
          %278 = sbr.rel (%p276) target = $region16
        $region15: #{tpu_custom_call.1} parent=11 // pred_region
          %p279 = scmp.lt.s32.totalorder %s30, 0
          %s280 = scalar_select %p279, %s30, 0
          %s281 = smul.addr %s280, 2
          %s282 = scalar_lea.vmem %s2, %s281
        $region16: #{tpu_custom_call.1} parent=11 // pred_fallthru
          _
        // Predicated region
        $region17: #{tpu_custom_call.1} parent=11 // pred_check
          %p283 = pneg %p141
        $region18: #{tpu_custom_call.1} parent=11 // pred_check_branch
          %285 = sbr.rel (%p283) target = $region20
        $region19: #{tpu_custom_call.1} parent=11 // pred_region
          %p286 = scmp.lt.s32.totalorder %s30, 0
          %s287 = scalar_select %p286, %s30, 0
          %s288 = smul.addr %s287, 2
          %s289 = scalar_lea.vmem %s3, %s288
        $region20: #{tpu_custom_call.1} parent=11 // pred_fallthru
          _
        // Predicated region
        $region21: #{tpu_custom_call.1} parent=11 // pred_check
          %p290 = pneg %p167
        $region22: #{tpu_custom_call.1} parent=11 // pred_check_branch
          %292 = sbr.rel (%p290) target = $region24
        $region23: #{tpu_custom_call.1} parent=11 // pred_region
          %p293 = scmp.lt.s32.totalorder %s30, 0
          %s294 = scalar_select %p293, %s30, 0
          %s295 = smul.addr %s294, 2
          %s296 = scalar_lea.vmem %s4, %s295
        $region24: #{tpu_custom_call.1} parent=11 // pred_fallthru
          _
        // Predicated region
        $region25: #{tpu_custom_call.1} parent=11 // pred_check
          %p297 = pneg %p188
        $region26: #{tpu_custom_call.1} parent=11 // pred_check_branch
          %299 = sbr.rel (%p297) target = $region28
        $region27: #{tpu_custom_call.1} parent=11 // pred_region
          _
        $region28: #{tpu_custom_call.1} parent=11 // pred_fallthru
          _
        // Predicated region
        $region29: #{tpu_custom_call.1} parent=11 // pred_check
          %p300 = pneg %p209
        $region30: #{tpu_custom_call.1} parent=11 // pred_check_branch
          %302 = sbr.rel (%p300) target = $region32
        $region31: #{tpu_custom_call.1} parent=11 // pred_region
          _
        $region32: #{tpu_custom_call.1} parent=11 // pred_fallthru
          _
        // Predicated region
        $region33: #{tpu_custom_call.1} parent=11 // pred_check
          %p303 = pneg %p235
        $region34: #{tpu_custom_call.1} parent=11 // pred_check_branch
          %305 = sbr.rel (%p303) target = $region36
        $region35: #{tpu_custom_call.1} parent=11 // pred_region
          %p306 = scmp.lt.s32.totalorder %s30, 0
          %s307 = scalar_select %p306, %s30, 0
          %s308 = smul.addr %s307, 2
          %s309 = scalar_lea.vmem %s7, %s308
        $region36: #{tpu_custom_call.1} parent=11 // pred_fallthru
          _
      $region12: #{tpu_custom_call.1} parent=5 // pred_fallthru
        _
      %p310 = scmp.lt.s32.totalorder %s21, 2
      // Predicated region
      $region37: #{tpu_custom_call.1} parent=5 // pred_check
        %p311 = pneg %p310
      $region38: #{tpu_custom_call.1} parent=5 // pred_check_branch
        %313 = sbr.rel (%p311) target = $region40
      $region39: #{tpu_custom_call.1} parent=5 // pred_region
        // Predicated region
        $region41: #{tpu_custom_call.1} parent=39 // pred_check
          %p314 = pneg %p55
        $region42: #{tpu_custom_call.1} parent=39 // pred_check_branch
          %316 = sbr.rel (%p314) target = $region44
        $region43: #{tpu_custom_call.1} parent=39 // pred_region
          %s317 = sand.u32 %s45, 1
          %s318 = scalar_lea.sflag [#allocation4], %s317
          %s319 = sand.u32 %s45, 1
          %s320 = smul.addr %s319, 32
          %s321 = scalar_lea.vmem [#allocation3], %s320
          %s322 = smul.u32 16, %s29
          %s324 = ssub.s32 512, 512
          %325 = vsyncadd %s318, %s324
          %s326 = smul.addr %s28, 32
          %s327 = sadd.s32 %s322, %s326
          %s328 = smul.addr %s327, 32
          %s329 = scalar_lea.hbm %s0, %s328
          %s331 = sshll.u32 %s321, 4
          %s332 = int_to_ptr.vmem [resolvable:$true] %s331
          %334 = dma.hbm_to_vmem [thread:$0]  %s329, 512, %s332, %s318
        $region44: #{tpu_custom_call.1} parent=39 // pred_fallthru
          _
        // Predicated region
        $region45: #{tpu_custom_call.1} parent=39 // pred_check
          %p335 = pneg %p83
        $region46: #{tpu_custom_call.1} parent=39 // pred_check_branch
          %337 = sbr.rel (%p335) target = $region48
        $region47: #{tpu_custom_call.1} parent=39 // pred_region
          %s338 = sand.u32 %s73, 1
          %s339 = scalar_lea.sflag [#allocation7], %s338
          %s340 = sand.u32 %s73, 1
          %s341 = smul.addr %s340, 32
          %s342 = scalar_lea.vmem [#allocation6], %s341
          %s343 = smul.u32 16, %s29
          %s345 = ssub.s32 512, 512
          %346 = vsyncadd %s339, %s345
          %s347 = smul.addr %s28, 32
          %s348 = sadd.s32 %s343, %s347
          %s349 = smul.addr %s348, 32
          %s350 = scalar_lea.hbm %s1, %s349
          %s352 = sshll.u32 %s342, 4
          %s353 = int_to_ptr.vmem [resolvable:$true] %s352
          %355 = dma.hbm_to_vmem [thread:$0]  %s350, 512, %s353, %s339
        $region48: #{tpu_custom_call.1} parent=39 // pred_fallthru
          _
      $region40: #{tpu_custom_call.1} parent=5 // pred_fallthru
        _
      %p356 = scmp.le.s32.totalorder 1, %s21
      %p357 = scmp.lt.s32.totalorder %s21, 3
      %p358 = pnand %p356, %p357
      %p359 = pneg %p358
      // Predicated region
      $region49: #{tpu_custom_call.1} parent=5 // pred_check
        _
      $region50: #{tpu_custom_call.1} parent=5 // pred_check_branch
        %361 = sbr.rel (%p358) target = $region52
      $region51: #{tpu_custom_call.1} parent=5 // pred_region
        %s362 = ssub.s32 %s21, 1
        %s363 = sand.u32 %s48, 1
        %s364 = scalar_lea.sflag [#allocation4], %s363
        %s365 = sand.u32 %s48, 1
        %s366 = smul.addr %s365, 32
        %s367 = scalar_lea.vmem [#allocation3], %s366
        // Predicated region
        $region53: #{tpu_custom_call.1} parent=51 // pred_check
          %p368 = pneg %p61
        $region54: #{tpu_custom_call.1} parent=51 // pred_check_branch
          %370 = sbr.rel (%p368) target = $region56
        $region55: #{tpu_custom_call.1} parent=51 // pred_region
          %371 = dma.done %s364, 512
        $region56: #{tpu_custom_call.1} parent=51 // pred_fallthru
          _
        %s372 = sand.u32 %s76, 1
        %s373 = scalar_lea.sflag [#allocation7], %s372
        %s374 = sand.u32 %s76, 1
        %s375 = smul.addr %s374, 32
        %s376 = scalar_lea.vmem [#allocation6], %s375
        // Predicated region
        $region57: #{tpu_custom_call.1} parent=51 // pred_check
          %p377 = pneg %p89
        $region58: #{tpu_custom_call.1} parent=51 // pred_check_branch
          %379 = sbr.rel (%p377) target = $region60
        $region59: #{tpu_custom_call.1} parent=51 // pred_region
          %380 = dma.done %s373, 512
        $region60: #{tpu_custom_call.1} parent=51 // pred_fallthru
          _
        %s381 = sand.u32 %s48, 1
        %s382 = scalar_lea.sflag [#allocation4], %s381
        %s383 = sand.u32 %s48, 1
        %s384 = smul.addr %s383, 32
        %s385 = scalar_lea.vmem [#allocation3], %s384
        %p386 = pneg %p61
        %p387 = pneg %p58
        %s388 = sand.u32 %s76, 1
        %s389 = scalar_lea.sflag [#allocation7], %s388
        %s390 = sand.u32 %s76, 1
        %s391 = smul.addr %s390, 32
        %s392 = scalar_lea.vmem [#allocation6], %s391
        %p393 = pneg %p89
        %p394 = pneg %p86
        %p395 = scmp.lt.s32.totalorder %s30, 0
        %s396 = scalar_select %p395, %s30, 0
        %s397 = smul.addr %s396, 2
        %s398 = scalar_lea.vmem %s2, %s397
        %p399 = pneg %p115
        %p400 = pneg %p112
        %p401 = scmp.lt.s32.totalorder %s30, 0
        %s402 = scalar_select %p401, %s30, 0
        %s403 = smul.addr %s402, 2
        %s404 = scalar_lea.vmem %s3, %s403
        %p405 = pneg %p141
        %p406 = pneg %p138
        %p407 = scmp.lt.s32.totalorder %s30, 0
        %s408 = scalar_select %p407, %s30, 0
        %s409 = smul.addr %s408, 2
        %s410 = scalar_lea.vmem %s4, %s409
        %p411 = pneg %p167
        %p412 = pneg %p164
        %p413 = pneg %p188
        %p414 = pneg %p185
        %p415 = pneg %p209
        %p416 = pneg %p206
        %p417 = scmp.lt.s32.totalorder %s30, 0
        %s418 = scalar_select %p417, %s30, 0
        %s419 = smul.addr %s418, 2
        %s420 = scalar_lea.vmem %s7, %s419
        %p421 = pneg %p235
        %p422 = pneg %p232
        %p423 = pneg %p261
        %p424 = pneg %p258
        %s425 = smul.u32 16, %s31
        %s426 = smul.u32 16, %s31
        %p427 = scmp.lt.s32.totalorder %s30, 0
        %s428 = scalar_select %p427, %s30, 0
        %s429 = smul.addr %s428, 2
        %s430 = scalar_lea.vmem %s2, %s429
        %p431 = scmp.lt.s32.totalorder %s30, 0
        %s432 = scalar_select %p431, %s30, 0
        %s433 = smul.addr %s432, 2
        %s434 = scalar_lea.vmem %s3, %s433
        %p435 = scmp.lt.s32.totalorder %s30, 0
        %s436 = scalar_select %p435, %s30, 0
        %s437 = smul.addr %s436, 2
        %s438 = scalar_lea.vmem %s4, %s437
        %p439 = scmp.lt.s32.totalorder %s30, 0
        %s440 = scalar_select %p439, %s30, 0
        %s441 = smul.addr %s440, 2
        %s442 = scalar_lea.vmem %s7, %s441
        %p443 = scmp.eq.s32.totalorder %s31, 0
        // Predicated region
        $region61: #{tpu_custom_call.1} parent=51 // pred_check
          %p444 = pneg %p443
        $region62: #{tpu_custom_call.1} parent=51 // pred_check_branch
          %446 = sbr.rel (%p444) target = $region64
        $region63: #{tpu_custom_call.1} parent=51 // pred_region
          %447 = vst [vmem:[#allocation2] sm:$0x3] 0.0
        $region64: #{tpu_custom_call.1} parent=51 // pred_fallthru
          _
        %v448 = vld [vmem:[%s367] sm:$0xff]
        %v449 = vld [vmem:[%s367 + $0x8] sm:$0xff]
        %v450 = vld [vmem:[%s367 + $0x10] sm:$0xff]
        %v451 = vld [vmem:[%s367 + $0x18] sm:$0xff]
        %v452 = vld [vmem:[%s376] sm:$0xff]
        %v453 = vld [vmem:[%s376 + $0x8] sm:$0xff]
        %v454 = vld [vmem:[%s376 + $0x10] sm:$0xff]
        %v455 = vld [vmem:[%s376 + $0x18] sm:$0xff]
        %v456 = vsub.f32 %v452, %v448
        %v457 = vsub.f32 %v453, %v449
        %v458 = vsub.f32 %v454, %v450
        %v459 = vsub.f32 %v455, %v451
        %v460 = vmul.f32 %v456, %v456
        %v461 = vmul.f32 %v457, %v457
        %v462 = vmul.f32 %v458, %v458
        %v463 = vmul.f32 %v459, %v459
        %v465 = vrot.slane %v460, 2
        %v467 = vadd.f32 %v460, %v465
        %v468 = vrot.slane %v460, 4
        %v470 = vadd.f32 %v467, %v468
        %v471 = vrot.slane %v460, 6
        %v473 = vadd.f32 %v470, %v471
        %v474 = vadd.f32 %v473, %v461
        %v476 = vrot.slane %v461, 2
        %v478 = vadd.f32 %v474, %v476
        %v479 = vrot.slane %v461, 4
        %v481 = vadd.f32 %v478, %v479
        %v482 = vrot.slane %v461, 6
        %v484 = vadd.f32 %v481, %v482
        %v485 = vadd.f32 %v484, %v462
        %v487 = vrot.slane %v462, 2
        %v489 = vadd.f32 %v485, %v487
        %v490 = vrot.slane %v462, 4
        %v492 = vadd.f32 %v489, %v490
        %v493 = vrot.slane %v462, 6
        %v495 = vadd.f32 %v492, %v493
        %v496 = vadd.f32 %v495, %v463
        %v498 = vrot.slane %v463, 2
        %v500 = vadd.f32 %v496, %v498
        %v501 = vrot.slane %v463, 4
        %v503 = vadd.f32 %v500, %v501
        %v504 = vrot.slane %v463, 6
        %v506 = vadd.f32 %v503, %v504
        %v507 = vld [vmem:[#allocation2] sm:$0x3]
        %v508 = vadd.f32 %v507, %v506
        %509 = vst [vmem:[#allocation2] sm:$0x3] %v508
        %p510 = scmp.eq.s32.totalorder %s31, 1
        // Predicated region
        $region65: #{tpu_custom_call.1} parent=51 // pred_check
          %p511 = pneg %p510
        $region66: #{tpu_custom_call.1} parent=51 // pred_check_branch
          %513 = sbr.rel (%p511) target = $region68
        $region67: #{tpu_custom_call.1} parent=51 // pred_region
          %v514 = vld [vmem:[#allocation2] sm:$0x3]
          %vm515 = vcmask 1041408
          %v516 = vsel %vm515, %v514, 0.0
          %517 = vadd.xlane.f32.xlu0 %v516
          %v518 = vpop.xlane.xlu0 %517
          %v519 = vrot.slane %v518, 4
          %v520 = vadd.f32 %v518, %v519
          %v521 = vrot.slane %v520, 2
          %v522 = vadd.f32 %v520, %v521
          %v523 = vrot.slane %v522, 1
          %v524 = vadd.f32 %v522, %v523
          %s525 = vtos %v524
          %v526 = vld [vmem:[%s430] sm:$0x3]
          %v527 = vld [vmem:[%s434] sm:$0x3]
          %v528 = vadd.f32 %v527, 1.0
          %v529 = vmul.f32 %v526, %v526
          %v530 = vsub.f32 %v528, %v529
          %v531 = vmul.f32 %v527, 1.442695
          %v532 = vpow.pop %v531
          %v533 = vsub.f32 %v530, %v532
          %v534 = vmul.f32 %v533, -0.5
          %vm535 = vcmask 254976
          %v536 = vsel %vm535, %v534, 0.0
          %537 = vadd.xlane.f32.xlu0 %v536
          %v538 = vpop.xlane.xlu0 %537
          %v539 = vrot.slane %v538, 4
          %v540 = vadd.f32 %v538, %v539
          %v541 = vrot.slane %v540, 2
          %v542 = vadd.f32 %v540, %v541
          %v543 = vrot.slane %v542, 1
          %v544 = vadd.f32 %v542, %v543
          %s545 = vtos %v544
          %v546 = vld [vmem:[%s438] sm:$0x3]
          %v547 = vld [vmem:[%s5] sm:$0xff]
          %v548 = vld [vmem:[%s5 + $0x8] sm:$0xff]
          %v549 = vld [vmem:[%s5 + $0x10] sm:$0xff]
          %v550 = vld [vmem:[%s5 + $0x18] sm:$0xff]
          %v551 = vld [vmem:[%s6] sm:$0x1]
          %v553 = vlaneseq
          %v554 = vshrl.u32 %v553, 7
          %v555 = vsub.s32 0, %v554
          %v556 = vrot.slane %v551, %v555
          %vm558 = vcmask 261120
          %v560 = vsel %vm558, %v546, 0
          %562 = vmatprep.subr.mxu0 0.0
          %563 = vmatpush1.msra.mxu0 0.0
          %564 = vmatprep.subr.mxu0 0.0
          %565 = vmatpush1.msra.mxu0 0.0
          %566 = vmatprep.subr.mxu0 0.0
          %567 = vmatpush1.msra.mxu0 0.0
          %568 = vmatprep.subr.mxu0 0.0
          %569 = vmatpush1.msra.mxu0 0.0
          %570 = vmatprep.subr.mxu0 0.0
          %571 = vmatpush1.msra.mxu0 0.0
          %572 = vmatprep.subr.mxu0 0.0
          %573 = vmatpush1.msra.mxu0 0.0
          %574 = vmatprep.subr.mxu0 0.0
          %575 = vmatpush1.msra.mxu0 0.0
          %576 = vmatprep.subr.mxu0 0.0
          %577 = vmatpush1.msra.mxu0 0.0
          %578 = vmatprep.subr.mxu0 0.0
          %579 = vmatpush1.msra.mxu0 0.0
          %580 = vmatprep.subr.mxu0 0.0
          %581 = vmatpush1.msra.mxu0 0.0
          %582 = vmatprep.subr.mxu0 0.0
          %583 = vmatpush1.msra.mxu0 0.0
          %584 = vmatprep.subr.mxu0 0.0
          %585 = vmatpush1.msra.mxu0 0.0
          %586 = vmatprep.subr.mxu0 0.0
          %587 = vmatpush1.msra.mxu0 %v550
          %588 = vmatprep.subr.mxu0 0.0
          %589 = vmatpush1.msra.mxu0 %v549
          %590 = vmatprep.subr.mxu0 0.0
          %591 = vmatpush1.msra.mxu0 %v548
          %592 = vmatprep.subr.mxu0 0.0
          %593 = vmatpush1.msra.mxu0 %v547
          %594 = vmatprep.subr.mxu0 0.0
          %595 = vmatpush2.msra.mxu0 0.0
          %596 = vmatprep.subr.mxu0 0.0
          %597 = vmatpush2.msra.mxu0 0.0
          %598 = vmatprep.subr.mxu0 0.0
          %599 = vmatpush2.msra.mxu0 0.0
          %600 = vmatprep.subr.mxu0 0.0
          %601 = vmatpush2.msra.mxu0 0.0
          %602 = vmatprep.subr.mxu0 0.0
          %603 = vmatpush2.msra.mxu0 0.0
          %604 = vmatprep.subr.mxu0 0.0
          %605 = vmatpush2.msra.mxu0 0.0
          %606 = vmatprep.subr.mxu0 0.0
          %607 = vmatpush2.msra.mxu0 0.0
          %608 = vmatprep.subr.mxu0 0.0
          %609 = vmatpush2.msra.mxu0 0.0
          %610 = vmatprep.subr.mxu0 0.0
          %611 = vmatpush2.msra.mxu0 0.0
          %612 = vmatprep.subr.mxu0 0.0
          %613 = vmatpush2.msra.mxu0 0.0
          %614 = vmatprep.subr.mxu0 0.0
          %615 = vmatpush2.msra.mxu0 0.0
          %616 = vmatprep.subr.mxu0 0.0
          %617 = vmatpush2.msra.mxu0 0.0
          %618 = vmatprep.subr.mxu0 0.0
          %619 = vmatpush2.msra.mxu0 0.0
          %620 = vmatprep.subr.mxu0 0.0
          %621 = vmatpush2.msra.mxu0 0.0
          %622 = vmatprep.subr.mxu0 0.0
          %623 = vmatpush2.msra.mxu0 0.0
          %624 = vmatprep.subr.mxu0 0.0
          %625 = vmatpush2.msra.mxu0 0.0
          %626 = vmatprep.mubr.f32.mxu0 0.0
          %627 = vmatmul.mubr.f32.gmra.mxu0 %v560
          %v628 = vpop.f32.mrf.mxu0
          %v629 = vadd.f32 %v556, %v628
          %v630 = vpop.f32.mrf.mxu0
          %631 = vdwg.mxu0
          %vm632 = vcmask 58368
          %v633 = vsel %vm632, %v629, -inf
          %634 = vmax.xlane.f32.xlu0 %v633
          %v635 = vpop.xlane.xlu0 %634
          %v636 = vsub.f32 %v629, %v635
          %v637 = vmul.f32 %v636, 1.442695
          %v638 = vpow.pop %v637
          %v639 = vsel %vm632, %v638, 0.0
          %640 = vadd.xlane.f32.xlu0 %v639
          %v641 = vpop.xlane.xlu0 %640
          %v642 = vlog2.pop %v641
          %v643 = vmul.f32 %v642, 0.6931472
          %v644 = vadd.f32 %v635, %v643
          %v645 = vld [vmem:[%s442] sm:$0x3]
          %v646 = vsub.f32 %v644, %v629
          %v647 = vmul.f32 %v645, %v646
          %v648 = vsel %vm632, %v647, 0.0
          %649 = vadd.xlane.f32.xlu0 %v648
          %v650 = vpop.xlane.xlu0 %649
          %v651 = vrot.slane %v650, 4
          %v652 = vadd.f32 %v650, %v651
          %v653 = vrot.slane %v652, 2
          %v654 = vadd.f32 %v652, %v653
          %v655 = vrot.slane %v654, 1
          %v656 = vadd.f32 %v654, %v655
          %s657 = vtos %v656
          %v658 = vlaneseq
          %v659 = vand.u32 %v658, 127
          %v660 = vlaneseq
          %v661 = vshrl.u32 %v660, 7
          %vm662 = vcmp.eq.s32.totalorder %v661, 0
          %vm663 = vcmp.eq.s32.totalorder %v659, 0
          %vm664 = vmand %vm662, %vm663
          %v665 = vstv %s525
          %v666 = vsel %vm664, %v665, 0.0
          %vm667 = vcmp.eq.s32.totalorder %v659, 1
          %vm668 = vmand %vm662, %vm667
          %v669 = vstv %s545
          %v670 = vsel %vm668, %v669, %v666
          %vm671 = vcmp.eq.s32.totalorder %v659, 2
          %vm672 = vmand %vm662, %vm671
          %v673 = vstv %s657
          %v674 = vsel %vm672, %v673, %v670
          %675 = vst [vmem:[#allocation8] sm:$0xff] %v674
        $region68: #{tpu_custom_call.1} parent=51 // pred_fallthru
          _
        // Predicated region
        $region69: #{tpu_custom_call.1} parent=51 // pred_check
          %p676 = pneg %p258
        $region70: #{tpu_custom_call.1} parent=51 // pred_check_branch
          %678 = sbr.rel (%p676) target = $region72
        $region71: #{tpu_custom_call.1} parent=51 // pred_region
          %s680 = ssub.s32 128, 128
          %681 = vsyncadd [#allocation5], %s680
          %s682 = smul.addr %s30, 128
          %s683 = scalar_lea.hbm %s8, %s682
          %s685 = sshll.u32 [#allocation8], 4
          %s686 = int_to_ptr.vmem [resolvable:$true] %s685
          %688 = dma.vmem_to_hbm [thread:$0]  %s686, 128, %s683, [#allocation5]
        $region72: #{tpu_custom_call.1} parent=51 // pred_fallthru
          _
        // Predicated region
        $region73: #{tpu_custom_call.1} parent=51 // pred_check
          %p689 = pneg %p258
        $region74: #{tpu_custom_call.1} parent=51 // pred_check_branch
          %691 = sbr.rel (%p689) target = $region76
        $region75: #{tpu_custom_call.1} parent=51 // pred_region
          %692 = dma.done [#allocation5], 128
        $region76: #{tpu_custom_call.1} parent=51 // pred_fallthru
          _
      $region52: #{tpu_custom_call.1} parent=5 // pred_fallthru
        _
      %p693 = scmp.le.s32.totalorder 2, %s21
      // Predicated region
      $region77: #{tpu_custom_call.1} parent=5 // pred_check
        %p694 = pneg %p693
      $region78: #{tpu_custom_call.1} parent=5 // pred_check_branch
        %696 = sbr.rel (%p694) target = $region80
      $region79: #{tpu_custom_call.1} parent=5 // pred_region
        %s697 = ssub.s32 %s21, 2
      $region80: #{tpu_custom_call.1} parent=5 // pred_fallthru
        _
    $region6: #{tpu_custom_call.1} parent=1 // loop_footer
      %s25 = sadd.s32 1, %s21
    $region7: #{tpu_custom_call.1} parent=1 // loop_footer_branch
      %20 = sbr.rel target = $region3
    $region8: #{tpu_custom_call.1} parent=1 // loop_exit
      _
    %698 = vsyncpa [#allocation4], 1
    %s699 = scalar_lea.sflag [#allocation4], 1
    %700 = vsyncpa %s699, 1
    %701 = vsyncpa [#allocation7], 1
    %s702 = scalar_lea.sflag [#allocation7], 1
    %703 = vsyncpa %s702, 1
    %704 = vsyncpa [#allocation5], 1
    %s705 = scalar_lea.sflag [#allocation5], 1
    %706 = vsyncpa %s705, 1

</llo_original>
